<compile_context>
chip_gen: v6e
topology: v6e:2x2x1
jax: 0.10.0
libtpu: 0.0.40
codegen_flags: <defaults>
</compile_context>

<pallas_src>
import jax
import jax.numpy as jnp
from jax import lax
from jax.experimental import pallas as pl
from jax.experimental.pallas import tpu as pltpu


def _device_defaults():
    """(per-input tile bytes, n_splits, vmem_limit_bytes) chosen from the device kind."""
    try:
        kind = jax.devices()[0].device_kind.lower()
    except Exception:
        kind = ""
    if "7" in kind:                       # v7x: 64 MiB VMEM, 2 TCs, ~3.2 TB/s HBM
        return 4 * 1024 * 1024, 2, 48 * 1024 * 1024
    if "v4" in kind or "v5p" in kind:     # megacore chips, 128 MiB VMEM
        return 8 * 1024 * 1024, 2, 80 * 1024 * 1024
    if "v5" in kind or "v6" in kind:      # v5e / v6e: 128 MiB VMEM, single TC
        return 8 * 1024 * 1024, 1, 80 * 1024 * 1024
    return 4 * 1024 * 1024, 1, 48 * 1024 * 1024   # unknown: conservative


def _pick_tiles(B, T, itemsize, tile_bytes):
    """Pick (TM, TN). TM is <= 8 or a multiple of 8; TN is T (full width) or 128-aligned."""
    max_elems = max(8 * 128, tile_bytes // itemsize)

    def legal_rows(budget_rows):
        if B <= 8:
            return B
        if B <= budget_rows:
            return B if B % 8 == 0 else (B // 8) * 8
        return max(8, (budget_rows // 8) * 8)

    # Path 1: full row width -> contiguous DMAs, no column mask, lane-dense reduction.
    if T <= 8192 and T * 8 <= max_elems:
        TN = T
        TM = legal_rows(max_elems // T)
        return TM, TN

    # Path 2: very wide rows -> 128-aligned column tiles (remainder columns masked).
    TM = legal_rows(512)
    cols_budget = max(128, (max_elems // max(TM, 1)) // 128 * 128)
    full_cols = (T // 128) * 128 if T >= 128 else T
    TN = min(cols_budget, max(128, full_cols))
    return TM, TN


def _pick_acc_cols(TN):
    """Fold the accumulator's lane dim down to a small 128-aligned chunk when possible."""
    for cand in (512, 256, 128):
        if TN > cand and TN % cand == 0:
            return cand
    return TN


def _make_mse_kernel(B, T, TM, TN, ACC_N, gm_per_split, n_splits,
                     needs_row_mask, needs_col_mask):
    fold_rows = (TM % 8 == 0) and (TM > 8)

    def fold(vals):
        # (TM, TN) f32 -> (acc_rows, ACC_N) via vreg-wise adds only (no cross-lane work).
        if fold_rows:
            vals = vals.reshape(TM // 8, 8, TN).sum(axis=0)          # (8, TN)
        if ACC_N < TN:
            acc = vals[:, :ACC_N]
            for c in range(1, TN // ACC_N):                          # lane-aligned chunks
                acc = acc + vals[:, c * ACC_N:(c + 1) * ACC_N]
            vals = acc
        return vals

    def kernel(orig_ref, recon_ref, out_ref, acc_ref):
        p = pl.program_id(0)   # parallel split (TensorCore) index
        i = pl.program_id(1)   # row-block index within the split
        j = pl.program_id(2)   # col-block index

        @pl.when(jnp.logical_and(i == 0, j == 0))
        def _init():
            acc_ref[...] = jnp.zeros_like(acc_ref)

        # Squared error for this tile (upcast inside the kernel; inputs may be bf16).
        diff = recon_ref[...].astype(jnp.float32) - orig_ref[...].astype(jnp.float32)
        sq = diff * diff

        if not (needs_row_mask or needs_col_mask):
            # No padding anywhere: single unmasked fast path.
            acc_ref[...] += fold(sq)
        else:
            # Only edge blocks carry padding; interior blocks take the unmasked path.
            edge = None
            if needs_row_mask:
                edge = jnp.logical_and(p == n_splits - 1, i == gm_per_split - 1)
            if needs_col_mask:
                col_edge = (j == pl.num_programs(2) - 1)
                edge = col_edge if edge is None else jnp.logical_or(edge, col_edge)

            @pl.when(edge)
            def _masked():
                masked = sq
                if needs_row_mask:
                    rows = (p * gm_per_split + i) * TM + lax.broadcasted_iota(
                        jnp.int32, (TM, 1), 0)
                    masked = jnp.where(rows < B, masked, jnp.float32(0.0))
                if needs_col_mask:
                    cols = j * TN + lax.broadcasted_iota(jnp.int32, (1, TN), 1)
                    masked = jnp.where(cols < T, masked, jnp.float32(0.0))
                acc_ref[...] += fold(masked)

            @pl.when(jnp.logical_not(edge))
            def _fast():
                acc_ref[...] += fold(sq)

        # Single cross-lane reduction per split, on the last step of its sub-grid.
        @pl.when(jnp.logical_and(i == gm_per_split - 1,
                                 j == pl.num_programs(2) - 1))
        def _finalize():
            total = jnp.sum(acc_ref[...])
            # Lane-dense, (8,128)-aligned output block; wrapper reads [p, 0, 0].
            out_ref[...] = jnp.full((1, 8, 128), total, dtype=jnp.float32)

    return kernel


def reconstruction_loss(original: jax.Array, reconstructed: jax.Array,
                        *, tile_bytes: int | None = None,
                        n_splits: int | None = None,
                        vmem_limit_bytes: int | None = None) -> jax.Array:
    """MSE(reconstructed, original) == mean((reconstructed - original)**2)."""
    assert original.shape == reconstructed.shape
    assert original.ndim == 2
    B, T = original.shape

    d_tile, d_splits, d_vmem = _device_defaults()
    tile_bytes = d_tile if tile_bytes is None else tile_bytes
    n_splits = d_splits if n_splits is None else n_splits
    vmem_limit_bytes = d_vmem if vmem_limit_bytes is None else vmem_limit_bytes

    itemsize = original.dtype.itemsize
    TM, TN = _pick_tiles(B, T, itemsize, tile_bytes)
    ACC_N = _pick_acc_cols(TN)
    acc_rows = 8 if (TM % 8 == 0 and TM > 8) else TM

    gm = pl.cdiv(B, TM)                    # total row-blocks
    gn = pl.cdiv(T, TN)                    # col-blocks
    # Only split the row-block axis when it divides evenly: no wasted, clamped DMAs.
    if n_splits > 1 and gm % n_splits != 0:
        n_splits = 1
    gm_per_split = gm // n_splits

    needs_row_mask = (B % TM) != 0
    needs_col_mask = (T % TN) != 0

    def in_map(p, i, j):
        return (p * gm_per_split + i, j)

    kernel = _make_mse_kernel(B, T, TM, TN, ACC_N, gm_per_split, n_splits,
                              needs_row_mask, needs_col_mask)

    partials = pl.pallas_call(
        kernel,
        out_shape=jax.ShapeDtypeStruct((n_splits, 8, 128), jnp.float32),
        grid_spec=pltpu.PrefetchScalarGridSpec(
            num_scalar_prefetch=0,
            grid=(n_splits, gm_per_split, gn),
            in_specs=[
                pl.BlockSpec((TM, TN), in_map),
                pl.BlockSpec((TM, TN), in_map),
            ],
            out_specs=pl.BlockSpec((1, 8, 128), lambda p, i, j: (p, 0, 0)),
            scratch_shapes=[pltpu.VMEM((acc_rows, ACC_N), jnp.float32)],
        ),
        compiler_params=pltpu.CompilerParams(
            dimension_semantics=("parallel", "arbitrary", "arbitrary"),
            vmem_limit_bytes=vmem_limit_bytes,
        ),
        cost_estimate=pl.CostEstimate(
            flops=3 * B * T,
            transcendentals=0,
            bytes_accessed=2 * B * T * itemsize + n_splits * 8 * 128 * 4,
        ),
    )(original, reconstructed)

    out_dtype = jnp.result_type(original.dtype, reconstructed.dtype)
    # Cross-split add + mean normalization in the wrapper (cheap scalar work).
    return (jnp.sum(partials[:, 0, 0]) / (B * T)).astype(out_dtype)


if __name__ == "__main__":
    # ReconstructionLoss has no learnable parameters; nothing to initialize.
    key = jax.random.PRNGKey(0)
    k1, k2 = jax.random.split(key)

    # Small shape matching the module's interface: [batch_size, n_token].
    batch_size, n_token = 2, 8
    original = jax.random.normal(k1, (batch_size, n_token), dtype=jnp.float32)
    reconstructed = jax.random.normal(k2, (batch_size, n_token), dtype=jnp.float32)

    loss = jax.block_until_ready(reconstruction_loss(original, reconstructed))
    ref = jnp.mean((reconstructed - original) ** 2)
    assert jnp.allclose(loss, ref, rtol=1e-6, atol=1e-6), (loss, ref)

    # Tiled / row-masked path at a non-aligned shape (full-row-width tiles, no col mask).
    k3, k4 = jax.random.split(k2)
    B2, T2 = 1030, 1300
    o2 = jax.random.normal(k3, (B2, T2), dtype=jnp.float32)
    r2 = jax.random.normal(k4, (B2, T2), dtype=jnp.float32)
    loss2 = jax.block_until_ready(reconstruction_loss(o2, r2))
    ref2 = jnp.mean((r2 - o2) ** 2)
    assert jnp.allclose(loss2, ref2, rtol=1e-4, atol=1e-4), (loss2, ref2)

    # Wide-row path (column tiling + col-edge mask + lane-group accumulator fold).
    k5, k6 = jax.random.split(k4)
    B3, T3 = 16, 9000
    o3 = jax.random.normal(k5, (B3, T3), dtype=jnp.float32)
    r3 = jax.random.normal(k6, (B3, T3), dtype=jnp.float32)
    loss3 = jax.block_until_ready(reconstruction_loss(o3, r3))
    ref3 = jnp.mean((r3 - o3) ** 2)
    assert jnp.allclose(loss3, ref3, rtol=1e-4, atol=1e-4), (loss3, ref3)

    print("KERNEL_OK")
</pallas_src>

<mosaic_0001>
module attributes {stable_mosaic.version = 11 : i64} {
  func.func @kernel(%arg0: i32, %arg1: i32, %arg2: i32, %arg3: memref<2x8xf32, #tpu.memory_space<vmem>>, %arg4: memref<2x8xf32, #tpu.memory_space<vmem>>, %arg5: memref<1x8x128xf32, #tpu.memory_space<vmem>>, %arg6: memref<2x8xf32, #tpu.memory_space<vmem>>) attributes {dimension_semantics = [#tpu.dimension_semantics<parallel>, #tpu.dimension_semantics<arbitrary>, #tpu.dimension_semantics<arbitrary>], iteration_bounds = array<i64: 1, 1, 1>, scalar_prefetch = 0 : i64, scratch_operands = 1 : i64, tpu.core_type = #tpu.core_type<tc>, window_params = [{transform_indices = @transform_0, window_bounds = array<i64: 2, 8>}, {transform_indices = @transform_1, window_bounds = array<i64: 2, 8>}, {transform_indices = @transform_2, window_bounds = array<i64: 1, 8, 128>}]} {
    %c0_i32 = arith.constant 0 : i32
    %0 = arith.cmpi eq, %arg1, %c0_i32 : i32
    %c0_i32_0 = arith.constant 0 : i32
    %1 = arith.cmpi eq, %arg2, %c0_i32_0 : i32
    %2 = arith.andi %0, %1 : i1
    %3 = arith.extui %2 : i1 to i32
    %c0_i32_1 = arith.constant 0 : i32
    %4 = arith.cmpi ne, %3, %c0_i32_1 : i32
    scf.if %4 {
      %cst = arith.constant 0.000000e+00 : f32
      %17 = vector.broadcast %cst : f32 to vector<2x8xf32>
      %c0_12 = arith.constant 0 : index
      %c0_13 = arith.constant 0 : index
      %18 = vector.load %arg6[%c0_12, %c0_13] : memref<2x8xf32, #tpu.memory_space<vmem>>, vector<2x8xf32>
      tpu.vector_store %arg6[%c0_12, %c0_13], %17 {strides = array<i32>} : memref<2x8xf32, #tpu.memory_space<vmem>>, vector<2x8xf32>,
    } else {
    }
    %c0 = arith.constant 0 : index
    %c0_2 = arith.constant 0 : index
    %5 = vector.load %arg4[%c0, %c0_2] : memref<2x8xf32, #tpu.memory_space<vmem>>, vector<2x8xf32>
    %c0_3 = arith.constant 0 : index
    %c0_4 = arith.constant 0 : index
    %6 = vector.load %arg3[%c0_3, %c0_4] : memref<2x8xf32, #tpu.memory_space<vmem>>, vector<2x8xf32>
    %7 = arith.subf %5, %6 : vector<2x8xf32>
    %8 = arith.mulf %7, %7 : vector<2x8xf32>
    %c0_5 = arith.constant 0 : index
    %c0_6 = arith.constant 0 : index
    %9 = vector.load %arg6[%c0_5, %c0_6] : memref<2x8xf32, #tpu.memory_space<vmem>>, vector<2x8xf32>
    %10 = arith.addf %9, %8 : vector<2x8xf32>
    %c0_7 = arith.constant 0 : index
    %c0_8 = arith.constant 0 : index
    %11 = vector.load %arg6[%c0_7, %c0_8] : memref<2x8xf32, #tpu.memory_space<vmem>>, vector<2x8xf32>
    tpu.vector_store %arg6[%c0_7, %c0_8], %10 {strides = array<i32>} : memref<2x8xf32, #tpu.memory_space<vmem>>, vector<2x8xf32>,
    %c0_i32_9 = arith.constant 0 : i32
    %12 = arith.cmpi eq, %arg1, %c0_i32_9 : i32
    %c0_i32_10 = arith.constant 0 : i32
    %13 = arith.cmpi eq, %arg2, %c0_i32_10 : i32
    %14 = arith.andi %12, %13 : i1
    %15 = arith.extui %14 : i1 to i32
    %c0_i32_11 = arith.constant 0 : i32
    %16 = arith.cmpi ne, %15, %c0_i32_11 : i32
    scf.if %16 {
      %c0_12 = arith.constant 0 : index
      %c0_13 = arith.constant 0 : index
      %17 = vector.load %arg6[%c0_12, %c0_13] : memref<2x8xf32, #tpu.memory_space<vmem>>, vector<2x8xf32>
      %18 = vector.shape_cast %17 : vector<2x8xf32> to vector<1x2x8xf32>
      %cst = arith.constant dense<0.000000e+00> : vector<1xf32>
      %19 = vector.multi_reduction <add>, %18, %cst [1, 2] : vector<1x2x8xf32> to vector<1xf32>
      %20 = vector.shape_cast %19 : vector<1xf32> to vector<1x1x1xf32>
      %21 = vector.extract %20[0, 0, 0] : f32 from vector<1x1x1xf32>
      %22 = vector.broadcast %21 : f32 to vector<1x8x128xf32>
      %c0_14 = arith.constant 0 : index
      %c0_15 = arith.constant 0 : index
      %c0_16 = arith.constant 0 : index
      %23 = vector.load %arg5[%c0_14, %c0_15, %c0_16] : memref<1x8x128xf32, #tpu.memory_space<vmem>>, vector<1x8x128xf32>
      tpu.vector_store %arg5[%c0_14, %c0_15, %c0_16], %22 {strides = array<i32>} : memref<1x8x128xf32, #tpu.memory_space<vmem>>, vector<1x8x128xf32>,
    } else {
    }
    return
  }
  func.func @transform_0(%arg0: i32, %arg1: i32, %arg2: i32) -> (i32, i32) {
    %c1_i32 = arith.constant 1 : i32
    %0 = arith.muli %arg0, %c1_i32 : i32
    %1 = arith.addi %0, %arg1 : i32
    %c0_i32 = arith.constant 0 : i32
    return %1, %arg2 : i32, i32
  }
  func.func @transform_1(%arg0: i32, %arg1: i32, %arg2: i32) -> (i32, i32) {
    %c1_i32 = arith.constant 1 : i32
    %0 = arith.muli %arg0, %c1_i32 : i32
    %1 = arith.addi %0, %arg1 : i32
    %c0_i32 = arith.constant 0 : i32
    return %1, %arg2 : i32, i32
  }
  func.func @transform_2(%arg0: i32, %arg1: i32, %arg2: i32) -> (i32, i32, i32) {
    %c0_i32 = arith.constant 0 : i32
    %c0_i32_0 = arith.constant 0 : i32
    %c0_i32_1 = arith.constant 0 : i32
    return %arg0, %c0_i32, %c0_i32_0 : i32, i32, i32
  }
}

</mosaic_0001>

<llo_original>
// kernel: tpu_custom_call.1
$region0: #{tpu_custom_call.1}
  #allocation0 [shape = 'u32[]', space=smem, size = 0x4, offset = 0x4, fixed_abs, tag = 'smem constant byte address 0x4 - core index']
  #allocation1 [shape = 'u32[144,128]{1,0:T(1,128)}', space=vmem, size = 0x12000, scoped, tag = 'internal scratch']
  #allocation2 [shape = 'f32[2,8]{1,0:T(2,128)}', space=vmem, size = 0x400, scoped, tag = 'scratch operand']
  %s0 = inlined_call_operand.hbm [shape: f32[2,8], index: 0, kind: input, shape index: {}]
  %s1 = inlined_call_operand.hbm [shape: f32[2,8], index: 1, kind: input, shape index: {}]
  %s2 = inlined_call_operand.hbm [shape: f32[1,8,128], index: 2, kind: output, shape index: {}]
  %s3 = sld [smem:[#allocation0]]
  $region34: #{tpu_custom_call.1} parent=0
    _
  %s5 = ssub.s32 1, %s3
  %s6 = scalar_select 0, %s5, %s3
  $region1: #{tpu_custom_call.1} parent=0
    #allocation3 [shape = 'u8[1024]{0}', space=vmem, size = 0x400, scoped, tag = 'input window, operand 0, single buffered']
    #allocation4 [shape = 's32[1]{0}', space=sflag, size = 0x4, scoped, tag = 'scoped memory for tpu_custom_call.1']
    #allocation5 [shape = 's32[1]{0}', space=sflag, size = 0x4, scoped, tag = 'scoped memory for tpu_custom_call.1']
    #allocation6 [shape = 'u8[1024]{0}', space=vmem, size = 0x400, scoped, tag = 'input window, operand 1, single buffered']
    #allocation7 [shape = 's32[1]{0}', space=sflag, size = 0x4, scoped, tag = 'scoped memory for tpu_custom_call.1']
    #allocation8 [shape = 'u8[4096]{0}', space=vmem, size = 0x1000, scoped, tag = 'output window, operand 0, single buffered']
    %7 = vsyncpa [#allocation4], 0
    %8 = vsyncpa [#allocation7], 0
    %9 = vsyncpa [#allocation5], 0
    // Predicated region
    $region2: #{tpu_custom_call.1} parent=1 // pred_check
      _
    $region3: #{tpu_custom_call.1} parent=1 // pred_check_branch
      %11 = sbr.rel (0) target = $region5
    $region4: #{tpu_custom_call.1} parent=1 // pred_region
      %s12 = sadd.s32 0, 0
      %s14 = ssub.s32 32, 32
      %15 = vsyncadd [#allocation4], %s14
      %s16 = smul.addr %s12, 32
      %s17 = scalar_lea.hbm %s0, %s16
      %s19 = sshll.u32 [#allocation3], 4
      %s20 = int_to_ptr.vmem [resolvable:$true] %s19
      %22 = dma.hbm_to_vmem [thread:$0]  %s17, 32, %s20, [#allocation4]
    $region5: #{tpu_custom_call.1} parent=1 // pred_fallthru
      _
    // Predicated region
    $region6: #{tpu_custom_call.1} parent=1 // pred_check
      _
    $region7: #{tpu_custom_call.1} parent=1 // pred_check_branch
      %24 = sbr.rel (0) target = $region9
    $region8: #{tpu_custom_call.1} parent=1 // pred_region
      %s25 = sadd.s32 0, 0
      %s27 = ssub.s32 32, 32
      %28 = vsyncadd [#allocation7], %s27
      %s29 = smul.addr %s25, 32
      %s30 = scalar_lea.hbm %s1, %s29
      %s32 = sshll.u32 [#allocation6], 4
      %s33 = int_to_ptr.vmem [resolvable:$true] %s32
      %35 = dma.hbm_to_vmem [thread:$0]  %s30, 32, %s33, [#allocation7]
    $region9: #{tpu_custom_call.1} parent=1 // pred_fallthru
      _
    // Predicated region
    $region10: #{tpu_custom_call.1} parent=1 // pred_check
      _
    $region11: #{tpu_custom_call.1} parent=1 // pred_check_branch
      %37 = sbr.rel (0) target = $region13
    $region12: #{tpu_custom_call.1} parent=1 // pred_region
      %38 = dma.done [#allocation4], 32
    $region13: #{tpu_custom_call.1} parent=1 // pred_fallthru
      _
    // Predicated region
    $region14: #{tpu_custom_call.1} parent=1 // pred_check
      _
    $region15: #{tpu_custom_call.1} parent=1 // pred_check_branch
      %40 = sbr.rel (0) target = $region17
    $region16: #{tpu_custom_call.1} parent=1 // pred_region
      %41 = dma.done [#allocation7], 32
    $region17: #{tpu_custom_call.1} parent=1 // pred_fallthru
      _
    %s42 = sadd.s32 0, 0
    %s43 = sadd.s32 0, 0
    %p44 = scmp.eq.s32.totalorder 0, 0
    %p45 = scmp.eq.s32.totalorder 0, 0
    %p46 = pnand %p44, %p45
    %p47 = pneg %p46
    // Predicated region
    $region18: #{tpu_custom_call.1} parent=1 // pred_check
      _
    $region19: #{tpu_custom_call.1} parent=1 // pred_check_branch
      %49 = sbr.rel (%p46) target = $region21
    $region20: #{tpu_custom_call.1} parent=1 // pred_region
      %vm50 = vcmask 58368
      %51 = vst.msk [vmem:[#allocation2] sm:$0x3] %vm50, 0.0
    $region21: #{tpu_custom_call.1} parent=1 // pred_fallthru
      _
    %v52 = vld [vmem:[#allocation6] sm:$0x3]
    %v53 = vld [vmem:[#allocation3] sm:$0x3]
    %v54 = vsub.f32 %v52, %v53
    %v55 = vmul.f32 %v54, %v54
    %v56 = vld [vmem:[#allocation2] sm:$0x3]
    %v57 = vadd.f32 %v56, %v55
    %vm58 = vcmask 58368
    %59 = vst.msk [vmem:[#allocation2] sm:$0x3] %vm58, %v57
    // Predicated region
    $region22: #{tpu_custom_call.1} parent=1 // pred_check
      _
    $region23: #{tpu_custom_call.1} parent=1 // pred_check_branch
      %61 = sbr.rel (%p46) target = $region25
    $region24: #{tpu_custom_call.1} parent=1 // pred_region
      %v62 = vld [vmem:[#allocation2] sm:$0x3]
      %v63 = vsel %vm58, %v62, 0.0
      %64 = vadd.xlane.f32.xlu0 %v63
      %v65 = vpop.xlane.xlu0 %64
      %v66 = vrot.slane %v65, 4
      %v67 = vadd.f32 %v65, %v66
      %v68 = vrot.slane %v67, 2
      %v69 = vadd.f32 %v67, %v68
      %v70 = vrot.slane %v69, 1
      %v71 = vadd.f32 %v69, %v70
      %s72 = vtos %v71
      %v73 = vstv %s72
      %74 = vst [vmem:[#allocation8] sm:$0xff] %v73
    $region25: #{tpu_custom_call.1} parent=1 // pred_fallthru
      _
    // Predicated region
    $region26: #{tpu_custom_call.1} parent=1 // pred_check
      _
    $region27: #{tpu_custom_call.1} parent=1 // pred_check_branch
      %76 = sbr.rel (0) target = $region29
    $region28: #{tpu_custom_call.1} parent=1 // pred_region
      %s78 = ssub.s32 128, 128
      %79 = vsyncadd [#allocation5], %s78
      %s81 = sshll.u32 [#allocation8], 4
      %s82 = int_to_ptr.vmem [resolvable:$true] %s81
      %84 = dma.vmem_to_hbm [thread:$0]  %s82, 128, %s2, [#allocation5]
    $region29: #{tpu_custom_call.1} parent=1 // pred_fallthru
      _
    // Predicated region
    $region30: #{tpu_custom_call.1} parent=1 // pred_check
      _
    $region31: #{tpu_custom_call.1} parent=1 // pred_check_branch
      %86 = sbr.rel (0) target = $region33
    $region32: #{tpu_custom_call.1} parent=1 // pred_region
      %87 = dma.done [#allocation5], 128
    $region33: #{tpu_custom_call.1} parent=1 // pred_fallthru
      _
    %88 = vsyncpa [#allocation4], 1
    %89 = vsyncpa [#allocation7], 1
    %90 = vsyncpa [#allocation5], 1

</llo_original>
